<compile_context>
chip_gen: v6e
topology: v6e:2x2x1
jax: 0.10.0
libtpu: 0.0.40
codegen_flags: <defaults>
</compile_context>

<pallas_src>
import functools

import jax
import jax.numpy as jnp
import numpy as np
from jax.experimental import pallas as pl
from jax.experimental.pallas import tpu as pltpu


_MIB = 1 << 20
_VMEM_FLOOR = 16 * _MIB        # conservative scoped-VMEM floor (valid everywhere)
_VMEM_CAP = 48 * _MIB          # safe on v7x (64 MiB physical) and v5e/v6e (128 MiB)
_FUSED_BUDGET = 40 * _MIB      # max VMEM residency for the single-pass fused path
_TILE_BUDGET = 16 * _MIB       # streaming-tile budget for the tiled fallback


def _vmem_limit(need_bytes):
    """VMEM limit derived from actual buffer sizes, floored/capped to values
    that are valid on every TPU generation."""
    return int(min(max(int(need_bytes) + 2 * _MIB, _VMEM_FLOOR), _VMEM_CAP))


def _choose_tile(S, C, itemsize, n_streams):
    """Largest spatial (lane-axis) tile -- a multiple of 128, or the full S --
    such that `n_streams` double-buffered (C, tile) blocks fit _TILE_BUDGET."""
    per_lane = max(1, 2 * n_streams * C * itemsize)
    ts = _TILE_BUDGET // per_lane
    if ts >= S:
        return S
    return int(max(128, (ts // 128) * 128))


def _excite_cols(y_col, w1t_ref, b1t_ref, w2t_ref, b2t_ref):
    """(C, 1) pooled means -> (C, 1) sigmoid gate (fc1 -> ReLU -> fc2 -> sigmoid),
    kept in column orientation so no lane<->sublane relayout is needed."""
    h = jnp.dot(w1t_ref[...], y_col, preferred_element_type=jnp.float32) + b1t_ref[...]
    h = jnp.maximum(h, 0.0)                                           # (Cr, 1)
    g = jnp.dot(w2t_ref[...], h, preferred_element_type=jnp.float32) + b2t_ref[...]
    return jax.nn.sigmoid(g)                                          # (C, 1)


# -----------------------------------------------------------------------------
# Fast path: single fused pass (squeeze + excite + scale), one read + one write
# -----------------------------------------------------------------------------
def _se_fused_kernel(x_ref, w1t_ref, b1t_ref, w2t_ref, b2t_ref, o_ref, *, inv_s):
    x = x_ref[...].astype(jnp.float32)                      # (C, S) resident block
    y = jnp.sum(x, axis=1, keepdims=True) * inv_s           # (C, 1) channel means
    g = _excite_cols(y, w1t_ref, b1t_ref, w2t_ref, b2t_ref)  # (C, 1) gate
    o_ref[...] = (x * g).astype(o_ref.dtype)                # lane-broadcast re-scale


def se_fused(x3, w1t, b1t, w2t, b2t):
    """x3: (B, C, S) -> x3 * gate, with the whole per-batch block VMEM-resident."""
    B, C, S = x3.shape
    block_bytes = C * S * x3.dtype.itemsize
    w_bytes = 4 * (w1t.size + b1t.size + w2t.size + b2t.size)
    need = 4 * block_bytes + w_bytes                        # double-buffered in + out
    kernel = functools.partial(_se_fused_kernel, inv_s=1.0 / S)
    return pl.pallas_call(
        kernel,
        out_shape=jax.ShapeDtypeStruct((B, C, S), x3.dtype),
        grid=(B,),
        in_specs=[
            pl.BlockSpec((None, C, S), lambda b: (b, 0, 0)),   # per-batch activation
            pl.BlockSpec(w1t.shape, lambda b: (0, 0)),         # resident weights
            pl.BlockSpec(b1t.shape, lambda b: (0, 0)),
            pl.BlockSpec(w2t.shape, lambda b: (0, 0)),
            pl.BlockSpec(b2t.shape, lambda b: (0, 0)),
        ],
        out_specs=pl.BlockSpec((None, C, S), lambda b: (b, 0, 0)),
        compiler_params=pltpu.CompilerParams(
            dimension_semantics=("parallel",),              # batch across 2 TCs on v7x
            vmem_limit_bytes=_vmem_limit(need),
        ),
    )(x3, w1t, b1t, w2t, b2t)


# -----------------------------------------------------------------------------
# Fallback kernel 1: tiled squeeze (spatial mean) + excitation epilogue
# -----------------------------------------------------------------------------
def _se_squeeze_excite_kernel(x_ref, w1t_ref, b1t_ref, w2t_ref, b2t_ref,
                              gate_ref, acc_ref, *, s_total, tile_s, needs_mask):
    s = pl.program_id(1)
    last = pl.num_programs(1) - 1

    @pl.when(s == 0)
    def _():
        acc_ref[...] = jnp.zeros_like(acc_ref)

    x = x_ref[...].astype(jnp.float32)                      # (C, tile_s)

    def _epilogue():
        y = acc_ref[...] * (1.0 / s_total)                  # (C, 1) channel means
        g = _excite_cols(y, w1t_ref, b1t_ref, w2t_ref, b2t_ref)
        gate_ref[...] = g.astype(gate_ref.dtype)            # (C, 1)

    if needs_mask:
        # Hot path stays a plain unmasked sum; mask only the ragged last tile.
        @pl.when(s < last)
        def _():
            acc_ref[...] += jnp.sum(x, axis=1, keepdims=True)

        @pl.when(s == last)
        def _():
            col = jax.lax.broadcasted_iota(jnp.int32, x.shape, 1) + s * tile_s
            xm = jnp.where(col < s_total, x, 0.0)
            acc_ref[...] += jnp.sum(xm, axis=1, keepdims=True)
            _epilogue()
    else:
        acc_ref[...] += jnp.sum(x, axis=1, keepdims=True)

        @pl.when(s == last)
        def _():
            _epilogue()


def se_squeeze_excite(x3, w1t, b1t, w2t, b2t, *, tile_s=None):
    """x3: (B, C, S) -> (B, C, 1) sigmoid gate (tiled spatial reduction)."""
    B, C, S = x3.shape
    ts = tile_s if tile_s is not None else _choose_tile(S, C, x3.dtype.itemsize, 1)
    ts = min(ts, S)
    n = pl.cdiv(S, ts)
    kernel = functools.partial(_se_squeeze_excite_kernel,
                               s_total=S, tile_s=ts, needs_mask=(S % ts) != 0)
    x_tile_bytes = C * ts * x3.dtype.itemsize
    w_bytes = 4 * (w1t.size + b1t.size + w2t.size + b2t.size)
    need = 2 * x_tile_bytes + w_bytes + 8 * C
    return pl.pallas_call(
        kernel,
        out_shape=jax.ShapeDtypeStruct((B, C, 1), jnp.float32),
        grid=(B, n),
        in_specs=[
            pl.BlockSpec((None, C, ts), lambda b, s: (b, 0, s)),
            pl.BlockSpec(w1t.shape, lambda b, s: (0, 0)),    # resident weights
            pl.BlockSpec(b1t.shape, lambda b, s: (0, 0)),
            pl.BlockSpec(w2t.shape, lambda b, s: (0, 0)),
            pl.BlockSpec(b2t.shape, lambda b, s: (0, 0)),
        ],
        out_specs=pl.BlockSpec((None, C, 1), lambda b, s: (b, 0, 0)),  # per-b gate
        scratch_shapes=[pltpu.VMEM((C, 1), jnp.float32)],              # per-b sums
        compiler_params=pltpu.CompilerParams(
            dimension_semantics=("parallel", "arbitrary"),   # b across TCs; s = reduction
            vmem_limit_bytes=_vmem_limit(need),
        ),
    )(x3, w1t, b1t, w2t, b2t)


# -----------------------------------------------------------------------------
# Fallback kernel 2: streaming channel re-scale, out = x * gate
# -----------------------------------------------------------------------------
def _se_scale_kernel(x_ref, g_ref, o_ref):
    g = g_ref[...]                                           # (C, 1) gate, read once
    # NOTE: the ragged last tile reads undefined lanes; the product of those
    # lanes is never written back (Pallas clips the out-of-bounds store).
    o_ref[...] = (x_ref[...].astype(jnp.float32) * g).astype(o_ref.dtype)


def se_scale(x3, gate, *, tile_s=None):
    """x3: (B, C, S), gate: (B, C, 1) -> (B, C, S)."""
    B, C, S = x3.shape
    ts = tile_s if tile_s is not None else _choose_tile(S, C, x3.dtype.itemsize, 2)
    ts = min(ts, S)
    n = pl.cdiv(S, ts)
    x_tile_bytes = C * ts * x3.dtype.itemsize
    need = 4 * x_tile_bytes + 2 * 4 * C
    return pl.pallas_call(
        _se_scale_kernel,
        out_shape=jax.ShapeDtypeStruct((B, C, S), x3.dtype),
        grid=(B, n),
        in_specs=[
            pl.BlockSpec((None, C, ts), lambda b, s: (b, 0, s)),
            pl.BlockSpec((None, C, 1), lambda b, s: (b, 0, 0)),   # per-b gate, resident
        ],
        out_specs=pl.BlockSpec((None, C, ts), lambda b, s: (b, 0, s)),
        compiler_params=pltpu.CompilerParams(
            dimension_semantics=("parallel", "parallel"),    # fully independent blocks
            vmem_limit_bytes=_vmem_limit(need),
        ),
    )(x3, gate)


# -----------------------------------------------------------------------------
# SEBlock forward (PyTorch-layout glue; no HBM transposes)
# -----------------------------------------------------------------------------
def se_block_forward(x_nchw, params, *, force_tiled=False, tile_s=None):
    """x_nchw: (B, C, H, W) like PyTorch; returns (B, C, H, W)."""
    B, C, H, W = x_nchw.shape
    S = H * W
    x3 = x_nchw.reshape(B, C, S)                             # free contiguous view

    # Column-orientation weights (tiny one-time transposes outside the kernels).
    w1t = params["w1"].T                                     # (Cr, C)
    b1t = params["b1"].reshape(-1, 1)                        # (Cr, 1)
    w2t = params["w2"].T                                     # (C, Cr)
    b2t = params["b2"].reshape(-1, 1)                        # (C, 1)

    block_bytes = C * S * x3.dtype.itemsize
    w_bytes = 4 * (w1t.size + b1t.size + w2t.size + b2t.size)
    fused_need = 4 * block_bytes + w_bytes + _MIB

    if not force_tiled and fused_need <= _FUSED_BUDGET:
        y3 = se_fused(x3, w1t, b1t, w2t, b2t)                # 1 read + 1 write of x
    else:
        gate = se_squeeze_excite(x3, w1t, b1t, w2t, b2t, tile_s=tile_s)
        y3 = se_scale(x3, gate, tile_s=tile_s)               # 2 reads + 1 write of x
    return y3.reshape(B, C, H, W)


def se_block_reference(x_nchw, params):
    """Pure-JAX reference matching the PyTorch SEBlock forward."""
    B, C, H, W = x_nchw.shape
    y = x_nchw.reshape(B, C, -1).mean(axis=2)                # (B, C)
    h = jnp.maximum(y @ params["w1"] + params["b1"], 0.0)
    g = jax.nn.sigmoid(h @ params["w2"] + params["b2"])
    return x_nchw * g.reshape(B, C, 1, 1)


# =============================================================================
if __name__ == "__main__":
    B, C, H, W = 2, 128, 16, 16
    reduction = 16
    Cr = C // reduction

    key = jax.random.PRNGKey(0)
    kx, k1, k2, k3, k4, kx2 = jax.random.split(key, 6)
    x = jax.random.normal(kx, (B, C, H, W), jnp.float32)

    # Linear weights stored pre-transposed vs. PyTorch: fc1 (C, Cr), fc2 (Cr, C).
    params = {
        "w1": jax.random.normal(k1, (C, Cr), jnp.float32) / np.sqrt(C),
        "b1": 0.01 * jax.random.normal(k2, (1, Cr), jnp.float32),
        "w2": jax.random.normal(k3, (Cr, C), jnp.float32) / np.sqrt(Cr),
        "b2": 0.01 * jax.random.normal(k4, (1, C), jnp.float32),
    }

    ref = se_block_reference(x, params)

    # Fast path: single fused pass (whole per-batch block resident in VMEM).
    out_fused = jax.block_until_ready(jax.jit(se_block_forward)(x, params))
    assert out_fused.shape == (B, C, H, W)
    np.testing.assert_allclose(np.asarray(out_fused), np.asarray(ref),
                               rtol=1e-3, atol=1e-4)

    # Large-activation fallback: tiled two-kernel path (forced, small tile).
    tiled_fn = jax.jit(functools.partial(se_block_forward, force_tiled=True, tile_s=128))
    out_tiled = jax.block_until_ready(tiled_fn(x, params))
    np.testing.assert_allclose(np.asarray(out_tiled), np.asarray(ref),
                               rtol=1e-3, atol=1e-4)

    # Fallback with a ragged last spatial tile (S = 144, tile = 128).
    x2 = jax.random.normal(kx2, (B, C, 12, 12), jnp.float32)
    ref2 = se_block_reference(x2, params)
    out_ragged = jax.block_until_ready(tiled_fn(x2, params))
    np.testing.assert_allclose(np.asarray(out_ragged), np.asarray(ref2),
                               rtol=1e-3, atol=1e-4)

    print("KERNEL_OK")
</pallas_src>

<mosaic_0001>
module attributes {stable_mosaic.version = 11 : i64} {
  func.func @_se_fused_kernel(%arg0: i32, %arg1: memref<1x128x256xf32, #tpu.memory_space<vmem>>, %arg2: memref<8x128xf32, #tpu.memory_space<vmem>>, %arg3: memref<8x1xf32, #tpu.memory_space<vmem>>, %arg4: memref<128x8xf32, #tpu.memory_space<vmem>>, %arg5: memref<128x1xf32, #tpu.memory_space<vmem>>, %arg6: memref<1x128x256xf32, #tpu.memory_space<vmem>>) attributes {dimension_semantics = [#tpu.dimension_semantics<parallel>], iteration_bounds = array<i64: 2>, scalar_prefetch = 0 : i64, scratch_operands = 0 : i64, tpu.core_type = #tpu.core_type<tc>, window_params = [{transform_indices = @transform_0, window_bounds = array<i64: 1, 128, 256>}, {pipeline_mode = #tpu.pipeline_mode<synchronous>, transform_indices = @transform_1, window_bounds = array<i64: 8, 128>}, {pipeline_mode = #tpu.pipeline_mode<synchronous>, transform_indices = @transform_2, window_bounds = array<i64: 8, 1>}, {pipeline_mode = #tpu.pipeline_mode<synchronous>, transform_indices = @transform_3, window_bounds = array<i64: 128, 8>}, {pipeline_mode = #tpu.pipeline_mode<synchronous>, transform_indices = @transform_4, window_bounds = array<i64: 128, 1>}, {transform_indices = @transform_5, window_bounds = array<i64: 1, 128, 256>}]} {
    %c0 = arith.constant 0 : index
    %c0_0 = arith.constant 0 : index
    %c0_1 = arith.constant 0 : index
    %0 = vector.load %arg1[%c0, %c0_0, %c0_1] : memref<1x128x256xf32, #tpu.memory_space<vmem>>, vector<1x128x256xf32>
    %1 = vector.shape_cast %0 : vector<1x128x256xf32> to vector<128x256xf32>
    %cst = arith.constant dense<0.000000e+00> : vector<128xf32>
    %2 = vector.multi_reduction <add>, %1, %cst [1] : vector<128x256xf32> to vector<128xf32>
    %3 = vector.shape_cast %2 : vector<128xf32> to vector<128x1xf32>
    %cst_2 = arith.constant 3.906250e-03 : f32
    %4 = vector.broadcast %cst_2 : f32 to vector<128x1xf32>
    %5 = arith.mulf %3, %4 : vector<128x1xf32>
    %c0_3 = arith.constant 0 : index
    %c0_4 = arith.constant 0 : index
    %6 = vector.load %arg2[%c0_3, %c0_4] : memref<8x128xf32, #tpu.memory_space<vmem>>, vector<8x128xf32>
    %cst_5 = arith.constant dense<0.000000e+00> : vector<8x1xf32>
    %7 = tpu.matmul %6, %5, %cst_5 {dimension_numbers = #tpu.dot_dimension_numbers<[1], [0], [0], [1], [0, 0, 1, 1], [], []>} : vector<8x128xf32>, vector<128x1xf32>, vector<8x1xf32> -> vector<8x1xf32>
    %c0_6 = arith.constant 0 : index
    %c0_7 = arith.constant 0 : index
    %8 = vector.load %arg3[%c0_6, %c0_7] : memref<8x1xf32, #tpu.memory_space<vmem>>, vector<8x1xf32>
    %9 = arith.addf %7, %8 : vector<8x1xf32>
    %cst_8 = arith.constant 0.000000e+00 : f32
    %10 = vector.broadcast %cst_8 : f32 to vector<8x1xf32>
    %11 = arith.maximumf %9, %10 : vector<8x1xf32>
    %c0_9 = arith.constant 0 : index
    %c0_10 = arith.constant 0 : index
    %12 = vector.load %arg4[%c0_9, %c0_10] : memref<128x8xf32, #tpu.memory_space<vmem>>, vector<128x8xf32>
    %cst_11 = arith.constant dense<0.000000e+00> : vector<128x1xf32>
    %13 = tpu.matmul %12, %11, %cst_11 {dimension_numbers = #tpu.dot_dimension_numbers<[1], [0], [0], [1], [0, 0, 1, 1], [], []>} : vector<128x8xf32>, vector<8x1xf32>, vector<128x1xf32> -> vector<128x1xf32>
    %c0_12 = arith.constant 0 : index
    %c0_13 = arith.constant 0 : index
    %14 = vector.load %arg5[%c0_12, %c0_13] : memref<128x1xf32, #tpu.memory_space<vmem>>, vector<128x1xf32>
    %15 = arith.addf %13, %14 : vector<128x1xf32>
    %16 = arith.negf %15 : vector<128x1xf32>
    %17 = math.exp %16 : vector<128x1xf32>
    %cst_14 = arith.constant 1.000000e+00 : f32
    %18 = vector.broadcast %cst_14 : f32 to vector<128x1xf32>
    %19 = arith.addf %18, %17 : vector<128x1xf32>
    %20 = arith.divf %18, %19 : vector<128x1xf32>
    %21 = vector.broadcast %20 : vector<128x1xf32> to vector<128x256xf32>
    %22 = arith.mulf %1, %21 : vector<128x256xf32>
    %c0_15 = arith.constant 0 : index
    %c0_16 = arith.constant 0 : index
    %c0_17 = arith.constant 0 : index
    %23 = vector.load %arg6[%c0_15, %c0_16, %c0_17] : memref<1x128x256xf32, #tpu.memory_space<vmem>>, vector<1x128x256xf32>
    %24 = vector.shape_cast %23 : vector<1x128x256xf32> to vector<128x256xf32>
    %25 = vector.shape_cast %22 : vector<128x256xf32> to vector<1x128x256xf32>
    tpu.vector_store %arg6[%c0_15, %c0_16, %c0_17], %25 {strides = array<i32>} : memref<1x128x256xf32, #tpu.memory_space<vmem>>, vector<1x128x256xf32>,
    return
  }
  func.func @transform_0(%arg0: i32) -> (i32, i32, i32) {
    %c0_i32 = arith.constant 0 : i32
    %c0_i32_0 = arith.constant 0 : i32
    %c0_i32_1 = arith.constant 0 : i32
    return %arg0, %c0_i32, %c0_i32_0 : i32, i32, i32
  }
  func.func @transform_1(%arg0: i32) -> (i32, i32) {
    %c0_i32 = arith.constant 0 : i32
    %c0_i32_0 = arith.constant 0 : i32
    %c0_i32_1 = arith.constant 0 : i32
    return %c0_i32, %c0_i32_0 : i32, i32
  }
  func.func @transform_2(%arg0: i32) -> (i32, i32) {
    %c0_i32 = arith.constant 0 : i32
    %c0_i32_0 = arith.constant 0 : i32
    %c0_i32_1 = arith.constant 0 : i32
    return %c0_i32, %c0_i32_0 : i32, i32
  }
  func.func @transform_3(%arg0: i32) -> (i32, i32) {
    %c0_i32 = arith.constant 0 : i32
    %c0_i32_0 = arith.constant 0 : i32
    %c0_i32_1 = arith.constant 0 : i32
    return %c0_i32, %c0_i32_0 : i32, i32
  }
  func.func @transform_4(%arg0: i32) -> (i32, i32) {
    %c0_i32 = arith.constant 0 : i32
    %c0_i32_0 = arith.constant 0 : i32
    %c0_i32_1 = arith.constant 0 : i32
    return %c0_i32, %c0_i32_0 : i32, i32
  }
  func.func @transform_5(%arg0: i32) -> (i32, i32, i32) {
    %c0_i32 = arith.constant 0 : i32
    %c0_i32_0 = arith.constant 0 : i32
    %c0_i32_1 = arith.constant 0 : i32
    return %arg0, %c0_i32, %c0_i32_0 : i32, i32, i32
  }
}

</mosaic_0001>

<llo_original>
// kernel: se_block_forward.1
$region0: #{se_block_forward.1}
  #allocation0 [shape = 'u32[]', space=smem, size = 0x4, offset = 0x4, fixed_abs, tag = 'smem constant byte address 0x4 - core index']
  #allocation1 [shape = 'u32[144,128]{1,0:T(1,128)}', space=vmem, size = 0x12000, scoped, tag = 'internal scratch']
  %s0 = inlined_call_operand.vmem [shape: f32[2,128,256], index: 0, kind: input, shape index: {}]
  %s1 = inlined_call_operand.vmem [shape: f32[8,128], index: 1, kind: input, shape index: {}]
  %s2 = inlined_call_operand.vmem [shape: f32[8,1], index: 2, kind: input, shape index: {}]
  %s3 = inlined_call_operand.vmem [shape: f32[128,8], index: 3, kind: input, shape index: {}]
  %s4 = inlined_call_operand.vmem [shape: f32[128,1], index: 4, kind: input, shape index: {}]
  %s5 = inlined_call_operand.vmem [shape: f32[2,128,256], index: 5, kind: output, shape index: {}]
  %s6 = sld [smem:[#allocation0]]
  $region53: #{se_block_forward.1} parent=0
    _
  %s8 = ssub.s32 1, %s6
  %s9 = scalar_select 0, %s8, %s6
  loop: start=0, step=1, limit=4
  $region2: #{se_block_forward.1} parent=0 // loop_pre_header
    _
  $region3: #{se_block_forward.1} parent=0 // loop_header
    %s11 = sphi 0, %s15
    %p12 = scmp.ge.s32.totalorder %s11, 4
    %s21 = sphi 0, %s23
    %s24 = sphi 0, %s21
    %s25 = sphi 0, %s24
    %s41 = sphi 0, %s25
    %s45 = sphi 0, %s45
    %s47 = sphi 0, %s45
    %s48 = sphi 0, %s47
    %s62 = sphi 0, %s48
    %s66 = sphi 0, %s66
    %s68 = sphi 0, %s66
    %s69 = sphi 0, %s68
    %s83 = sphi 0, %s69
    %s87 = sphi 0, %s87
    %s89 = sphi 0, %s87
    %s90 = sphi 0, %s89
    %s104 = sphi 0, %s90
    %s108 = sphi 0, %s108
    %s110 = sphi 0, %s108
    %s111 = sphi 0, %s110
    %s125 = sphi 0, %s111
    %s131 = sphi 0, %s133
    %s134 = sphi 0, %s131
    %s135 = sphi 0, %s134
    %s151 = sphi 0, %s135
  $region4: #{se_block_forward.1} parent=0 // loop_header_branch
    %14 = sbr.rel (%p12) target = $region8
  $region5: #{se_block_forward.1} parent=0 // loop_body
    %s16 = ssub.s32 %s11, 1
    %s17 = ssub.s32 %s11, 2
    %s18 = sadd.s32 %s11, 1
    %s19 = ssub.s32 %s11, %s18
    %p20 = scmp.eq.s32.totalorder %s19, 0
    %s22 = sadd.s32 %s21, 1
    %s23 = scalar_select %p20, %s21, %s22
    %p26 = pneg %p20
    %p27 = scmp.eq.s32.totalorder %s11, 1
    %p28 = por %p26, %p27
    %p29 = scmp.ne.s32.totalorder %s21, %s24
    %p30 = scmp.eq.s32.totalorder %s11, 0
    %p31 = por %p29, %p30
    %p32 = scmp.ne.s32.totalorder %s21, %s24
    %p33 = scmp.eq.s32.totalorder %s16, 1
    %p34 = por %p32, %p33
    %p35 = scmp.ne.s32.totalorder %s24, %s25
    %p36 = scmp.eq.s32.totalorder %s16, 0
    %p37 = por %p35, %p36
    %p38 = scmp.ne.s32.totalorder %s24, %s25
    %p39 = scmp.eq.s32.totalorder %s17, 1
    %p40 = por %p38, %p39
    %p42 = scmp.ne.s32.totalorder %s25, %s41
    %p43 = scmp.eq.s32.totalorder %s17, 0
    %p44 = por %p42, %p43
    %s46 = sadd.s32 %s45, 1
    %p49 = scmp.eq.s32.totalorder %s11, 1
    %p50 = scmp.ne.s32.totalorder %s45, %s47
    %p51 = scmp.eq.s32.totalorder %s11, 0
    %p52 = por %p50, %p51
    %p53 = scmp.ne.s32.totalorder %s45, %s47
    %p54 = scmp.eq.s32.totalorder %s16, 1
    %p55 = por %p53, %p54
    %p56 = scmp.ne.s32.totalorder %s47, %s48
    %p57 = scmp.eq.s32.totalorder %s16, 0
    %p58 = por %p56, %p57
    %p59 = scmp.ne.s32.totalorder %s47, %s48
    %p60 = scmp.eq.s32.totalorder %s17, 1
    %p61 = por %p59, %p60
    %p63 = scmp.ne.s32.totalorder %s48, %s62
    %p64 = scmp.eq.s32.totalorder %s17, 0
    %p65 = por %p63, %p64
    %s67 = sadd.s32 %s66, 1
    %p70 = scmp.eq.s32.totalorder %s11, 1
    %p71 = scmp.ne.s32.totalorder %s66, %s68
    %p72 = scmp.eq.s32.totalorder %s11, 0
    %p73 = por %p71, %p72
    %p74 = scmp.ne.s32.totalorder %s66, %s68
    %p75 = scmp.eq.s32.totalorder %s16, 1
    %p76 = por %p74, %p75
    %p77 = scmp.ne.s32.totalorder %s68, %s69
    %p78 = scmp.eq.s32.totalorder %s16, 0
    %p79 = por %p77, %p78
    %p80 = scmp.ne.s32.totalorder %s68, %s69
    %p81 = scmp.eq.s32.totalorder %s17, 1
    %p82 = por %p80, %p81
    %p84 = scmp.ne.s32.totalorder %s69, %s83
    %p85 = scmp.eq.s32.totalorder %s17, 0
    %p86 = por %p84, %p85
    %s88 = sadd.s32 %s87, 1
    %p91 = scmp.eq.s32.totalorder %s11, 1
    %p92 = scmp.ne.s32.totalorder %s87, %s89
    %p93 = scmp.eq.s32.totalorder %s11, 0
    %p94 = por %p92, %p93
    %p95 = scmp.ne.s32.totalorder %s87, %s89
    %p96 = scmp.eq.s32.totalorder %s16, 1
    %p97 = por %p95, %p96
    %p98 = scmp.ne.s32.totalorder %s89, %s90
    %p99 = scmp.eq.s32.totalorder %s16, 0
    %p100 = por %p98, %p99
    %p101 = scmp.ne.s32.totalorder %s89, %s90
    %p102 = scmp.eq.s32.totalorder %s17, 1
    %p103 = por %p101, %p102
    %p105 = scmp.ne.s32.totalorder %s90, %s104
    %p106 = scmp.eq.s32.totalorder %s17, 0
    %p107 = por %p105, %p106
    %s109 = sadd.s32 %s108, 1
    %p112 = scmp.eq.s32.totalorder %s11, 1
    %p113 = scmp.ne.s32.totalorder %s108, %s110
    %p114 = scmp.eq.s32.totalorder %s11, 0
    %p115 = por %p113, %p114
    %p116 = scmp.ne.s32.totalorder %s108, %s110
    %p117 = scmp.eq.s32.totalorder %s16, 1
    %p118 = por %p116, %p117
    %p119 = scmp.ne.s32.totalorder %s110, %s111
    %p120 = scmp.eq.s32.totalorder %s16, 0
    %p121 = por %p119, %p120
    %p122 = scmp.ne.s32.totalorder %s110, %s111
    %p123 = scmp.eq.s32.totalorder %s17, 1
    %p124 = por %p122, %p123
    %p126 = scmp.ne.s32.totalorder %s111, %s125
    %p127 = scmp.eq.s32.totalorder %s17, 0
    %p128 = por %p126, %p127
    %s129 = ssub.s32 %s11, %s18
    %p130 = scmp.eq.s32.totalorder %s129, 0
    %s132 = sadd.s32 %s131, 1
    %s133 = scalar_select %p130, %s131, %s132
    %p136 = pneg %p130
    %p137 = scmp.eq.s32.totalorder %s11, 1
    %p138 = por %p136, %p137
    %p139 = scmp.ne.s32.totalorder %s131, %s134
    %p140 = scmp.eq.s32.totalorder %s11, 0
    %p141 = por %p139, %p140
    %p142 = scmp.ne.s32.totalorder %s131, %s134
    %p143 = scmp.eq.s32.totalorder %s16, 1
    %p144 = por %p142, %p143
    %p145 = scmp.ne.s32.totalorder %s134, %s135
    %p146 = scmp.eq.s32.totalorder %s16, 0
    %p147 = por %p145, %p146
    %p148 = scmp.ne.s32.totalorder %s134, %s135
    %p149 = scmp.eq.s32.totalorder %s17, 1
    %p150 = por %p148, %p149
    %p152 = scmp.ne.s32.totalorder %s135, %s151
    %p153 = scmp.eq.s32.totalorder %s17, 0
    %p154 = por %p152, %p153
    %p155 = scmp.le.s32.totalorder 1, %s11
    %p156 = scmp.lt.s32.totalorder %s11, 3
    %p157 = pnand %p155, %p156
    %p158 = pneg %p157
    // Predicated region
    $region9: #{se_block_forward.1} parent=5 // pred_check
      _
    $region10: #{se_block_forward.1} parent=5 // pred_check_branch
      %160 = sbr.rel (%p157) target = $region12
    $region11: #{se_block_forward.1} parent=5 // pred_region
      %s161 = ssub.s32 %s11, 1
      // Predicated region
      $region13: #{se_block_forward.1} parent=11 // pred_check
        %p162 = pneg %p58
      $region14: #{se_block_forward.1} parent=11 // pred_check_branch
        %164 = sbr.rel (%p162) target = $region16
      $region15: #{se_block_forward.1} parent=11 // pred_region
        _
      $region16: #{se_block_forward.1} parent=11 // pred_fallthru
        _
      // Predicated region
      $region17: #{se_block_forward.1} parent=11 // pred_check
        %p165 = pneg %p79
      $region18: #{se_block_forward.1} parent=11 // pred_check_branch
        %167 = sbr.rel (%p165) target = $region20
      $region19: #{se_block_forward.1} parent=11 // pred_region
        _
      $region20: #{se_block_forward.1} parent=11 // pred_fallthru
        _
      // Predicated region
      $region21: #{se_block_forward.1} parent=11 // pred_check
        %p168 = pneg %p100
      $region22: #{se_block_forward.1} parent=11 // pred_check_branch
        %170 = sbr.rel (%p168) target = $region24
      $region23: #{se_block_forward.1} parent=11 // pred_region
        _
      $region24: #{se_block_forward.1} parent=11 // pred_fallthru
        _
      // Predicated region
      $region25: #{se_block_forward.1} parent=11 // pred_check
        %p171 = pneg %p121
      $region26: #{se_block_forward.1} parent=11 // pred_check_branch
        %173 = sbr.rel (%p171) target = $region28
      $region27: #{se_block_forward.1} parent=11 // pred_region
        _
      $region28: #{se_block_forward.1} parent=11 // pred_fallthru
        _
    $region12: #{se_block_forward.1} parent=5 // pred_fallthru
      _
    %p174 = scmp.lt.s32.totalorder %s11, 2
    // Predicated region
    $region29: #{se_block_forward.1} parent=5 // pred_check
      %p175 = pneg %p174
    $region30: #{se_block_forward.1} parent=5 // pred_check_branch
      %177 = sbr.rel (%p175) target = $region32
    $region31: #{se_block_forward.1} parent=5 // pred_region
      // Predicated region
      $region33: #{se_block_forward.1} parent=31 // pred_check
        %p178 = pneg %p31
      $region34: #{se_block_forward.1} parent=31 // pred_check_branch
        %180 = sbr.rel (%p178) target = $region36
      $region35: #{se_block_forward.1} parent=31 // pred_region
        %p181 = scmp.lt.s32.totalorder %s11, 1
        %s182 = scalar_select %p181, %s11, 1
        %s183 = smul.addr %s182, 32
        %s184 = smul.addr %s183, 8
        %s185 = scalar_lea.vmem %s0, %s184
      $region36: #{se_block_forward.1} parent=31 // pred_fallthru
        _
    $region32: #{se_block_forward.1} parent=5 // pred_fallthru
      _
    %p186 = scmp.le.s32.totalorder 1, %s11
    %p187 = scmp.lt.s32.totalorder %s11, 3
    %p188 = pnand %p186, %p187
    %p189 = pneg %p188
    // Predicated region
    $region37: #{se_block_forward.1} parent=5 // pred_check
      _
    $region38: #{se_block_forward.1} parent=5 // pred_check_branch
      %191 = sbr.rel (%p188) target = $region40
    $region39: #{se_block_forward.1} parent=5 // pred_region
      %s192 = ssub.s32 %s11, 1
      %p193 = scmp.lt.s32.totalorder %s16, 1
      %s194 = scalar_select %p193, %s16, 1
      %s195 = smul.addr %s194, 32
      %s196 = smul.addr %s195, 8
      %s197 = scalar_lea.vmem %s0, %s196
      %p198 = pneg %p37
      %p199 = pneg %p34
      %p200 = pneg %p58
      %p201 = pneg %p55
      %p202 = pneg %p79
      %p203 = pneg %p76
      %p204 = pneg %p100
      %p205 = pneg %p97
      %p206 = pneg %p121
      %p207 = pneg %p118
      %p208 = pneg %p147
      %p209 = pneg %p144
      %p210 = scmp.lt.s32.totalorder %s16, 1
      %s211 = scalar_select %p210, %s16, 1
      %s212 = smul.addr %s211, 32
      %s213 = smul.addr %s212, 8
      %s214 = scalar_lea.vmem %s5, %s213
      %p215 = scmp.lt.s32.totalorder %s16, 1
      %s216 = scalar_select %p215, %s16, 1
      %s217 = smul.addr %s216, 32
      %s218 = smul.addr %s217, 8
      %s219 = scalar_lea.vmem %s0, %s218
      %p220 = scmp.lt.s32.totalorder %s16, 1
      %s221 = scalar_select %p220, %s16, 1
      %s222 = smul.addr %s221, 32
      %s223 = smul.addr %s222, 8
      %s224 = scalar_lea.vmem %s5, %s223
      %v225 = vld [vmem:[%s219] sm:$0xff]
      %v226 = vld [vmem:[%s219 + $0x8] sm:$0xff]
      %v227 = vld [vmem:[%s219 + $0x10] sm:$0xff]
      %v228 = vld [vmem:[%s219 + $0x18] sm:$0xff]
      %v229 = vld [vmem:[%s219 + $0x20] sm:$0xff]
      %v230 = vld [vmem:[%s219 + $0x28] sm:$0xff]
      %v231 = vld [vmem:[%s219 + $0x30] sm:$0xff]
      %v232 = vld [vmem:[%s219 + $0x38] sm:$0xff]
      %v233 = vld [vmem:[%s219 + $0x40] sm:$0xff]
      %v234 = vld [vmem:[%s219 + $0x48] sm:$0xff]
      %v235 = vld [vmem:[%s219 + $0x50] sm:$0xff]
      %v236 = vld [vmem:[%s219 + $0x58] sm:$0xff]
      %v237 = vld [vmem:[%s219 + $0x60] sm:$0xff]
      %v238 = vld [vmem:[%s219 + $0x68] sm:$0xff]
      %v239 = vld [vmem:[%s219 + $0x70] sm:$0xff]
      %v240 = vld [vmem:[%s219 + $0x78] sm:$0xff]
      %v241 = vld [vmem:[%s219 + $0x80] sm:$0xff]
      %v242 = vld [vmem:[%s219 + $0x88] sm:$0xff]
      %v243 = vld [vmem:[%s219 + $0x90] sm:$0xff]
      %v244 = vld [vmem:[%s219 + $0x98] sm:$0xff]
      %v245 = vld [vmem:[%s219 + $0xa0] sm:$0xff]
      %v246 = vld [vmem:[%s219 + $0xa8] sm:$0xff]
      %v247 = vld [vmem:[%s219 + $0xb0] sm:$0xff]
      %v248 = vld [vmem:[%s219 + $0xb8] sm:$0xff]
      %v249 = vld [vmem:[%s219 + $0xc0] sm:$0xff]
      %v250 = vld [vmem:[%s219 + $0xc8] sm:$0xff]
      %v251 = vld [vmem:[%s219 + $0xd0] sm:$0xff]
      %v252 = vld [vmem:[%s219 + $0xd8] sm:$0xff]
      %v253 = vld [vmem:[%s219 + $0xe0] sm:$0xff]
      %v254 = vld [vmem:[%s219 + $0xe8] sm:$0xff]
      %v255 = vld [vmem:[%s219 + $0xf0] sm:$0xff]
      %v256 = vld [vmem:[%s219 + $0xf8] sm:$0xff]
      %v257 = vadd.f32 %v225, %v226
      %258 = vadd.xlane.f32.xlu0 %v257
      %v259 = vpop.xlane.xlu0 %258
      %v260 = vadd.f32 %v227, %v228
      %261 = vadd.xlane.f32.xlu0 %v260
      %v262 = vpop.xlane.xlu0 %261
      %v263 = vadd.f32 %v229, %v230
      %264 = vadd.xlane.f32.xlu0 %v263
      %v265 = vpop.xlane.xlu0 %264
      %v266 = vadd.f32 %v231, %v232
      %267 = vadd.xlane.f32.xlu0 %v266
      %v268 = vpop.xlane.xlu0 %267
      %v269 = vadd.f32 %v233, %v234
      %270 = vadd.xlane.f32.xlu0 %v269
      %v271 = vpop.xlane.xlu0 %270
      %v272 = vadd.f32 %v235, %v236
      %273 = vadd.xlane.f32.xlu0 %v272
      %v274 = vpop.xlane.xlu0 %273
      %v275 = vadd.f32 %v237, %v238
      %276 = vadd.xlane.f32.xlu0 %v275
      %v277 = vpop.xlane.xlu0 %276
      %v278 = vadd.f32 %v239, %v240
      %279 = vadd.xlane.f32.xlu0 %v278
      %v280 = vpop.xlane.xlu0 %279
      %v281 = vadd.f32 %v241, %v242
      %282 = vadd.xlane.f32.xlu0 %v281
      %v283 = vpop.xlane.xlu0 %282
      %v284 = vadd.f32 %v243, %v244
      %285 = vadd.xlane.f32.xlu0 %v284
      %v286 = vpop.xlane.xlu0 %285
      %v287 = vadd.f32 %v245, %v246
      %288 = vadd.xlane.f32.xlu0 %v287
      %v289 = vpop.xlane.xlu0 %288
      %v290 = vadd.f32 %v247, %v248
      %291 = vadd.xlane.f32.xlu0 %v290
      %v292 = vpop.xlane.xlu0 %291
      %v293 = vadd.f32 %v249, %v250
      %294 = vadd.xlane.f32.xlu0 %v293
      %v295 = vpop.xlane.xlu0 %294
      %v296 = vadd.f32 %v251, %v252
      %297 = vadd.xlane.f32.xlu0 %v296
      %v298 = vpop.xlane.xlu0 %297
      %v299 = vadd.f32 %v253, %v254
      %300 = vadd.xlane.f32.xlu0 %v299
      %v301 = vpop.xlane.xlu0 %300
      %v302 = vadd.f32 %v255, %v256
      %303 = vadd.xlane.f32.xlu0 %v302
      %v304 = vpop.xlane.xlu0 %303
      %v305 = vmul.f32 %v259, 0.00390625
      %v306 = vmul.f32 %v262, 0.00390625
      %v307 = vmul.f32 %v265, 0.00390625
      %v308 = vmul.f32 %v268, 0.00390625
      %v309 = vmul.f32 %v271, 0.00390625
      %v310 = vmul.f32 %v274, 0.00390625
      %v311 = vmul.f32 %v277, 0.00390625
      %v312 = vmul.f32 %v280, 0.00390625
      %v313 = vmul.f32 %v283, 0.00390625
      %v314 = vmul.f32 %v286, 0.00390625
      %v315 = vmul.f32 %v289, 0.00390625
      %v316 = vmul.f32 %v292, 0.00390625
      %v317 = vmul.f32 %v295, 0.00390625
      %v318 = vmul.f32 %v298, 0.00390625
      %v319 = vmul.f32 %v301, 0.00390625
      %v320 = vmul.f32 %v304, 0.00390625
      %v321 = vld [vmem:[%s1] sm:$0xff]
      %v322 = vld [vmem:[%s2] sm:$0xff]
      %323 = vmatprep.subr.mxu0 0.0
      %324 = vmatpush1.msra.mxu0 %v320
      %325 = vmatprep.subr.mxu0 0.0
      %326 = vmatpush1.msra.mxu0 %v319
      %327 = vmatprep.subr.mxu0 0.0
      %328 = vmatpush1.msra.mxu0 %v318
      %329 = vmatprep.subr.mxu0 0.0
      %330 = vmatpush1.msra.mxu0 %v317
      %331 = vmatprep.subr.mxu0 0.0
      %332 = vmatpush1.msra.mxu0 %v316
      %333 = vmatprep.subr.mxu0 0.0
      %334 = vmatpush1.msra.mxu0 %v315
      %335 = vmatprep.subr.mxu0 0.0
      %336 = vmatpush1.msra.mxu0 %v314
      %337 = vmatprep.subr.mxu0 0.0
      %338 = vmatpush1.msra.mxu0 %v313
      %339 = vmatprep.subr.mxu0 0.0
      %340 = vmatpush1.msra.mxu0 %v312
      %341 = vmatprep.subr.mxu0 0.0
      %342 = vmatpush1.msra.mxu0 %v311
      %343 = vmatprep.subr.mxu0 0.0
      %344 = vmatpush1.msra.mxu0 %v310
      %345 = vmatprep.subr.mxu0 0.0
      %346 = vmatpush1.msra.mxu0 %v309
      %347 = vmatprep.subr.mxu0 0.0
      %348 = vmatpush1.msra.mxu0 %v308
      %349 = vmatprep.subr.mxu0 0.0
      %350 = vmatpush1.msra.mxu0 %v307
      %351 = vmatprep.subr.mxu0 0.0
      %352 = vmatpush1.msra.mxu0 %v306
      %353 = vmatprep.subr.mxu0 0.0
      %354 = vmatpush1.msra.mxu0 %v305
      %355 = vmatprep.subr.mxu0 0.0
      %356 = vmatpush2.msra.mxu0 0.0
      %357 = vmatprep.subr.mxu0 0.0
      %358 = vmatpush2.msra.mxu0 0.0
      %359 = vmatprep.subr.mxu0 0.0
      %360 = vmatpush2.msra.mxu0 0.0
      %361 = vmatprep.subr.mxu0 0.0
      %362 = vmatpush2.msra.mxu0 0.0
      %363 = vmatprep.subr.mxu0 0.0
      %364 = vmatpush2.msra.mxu0 0.0
      %365 = vmatprep.subr.mxu0 0.0
      %366 = vmatpush2.msra.mxu0 0.0
      %367 = vmatprep.subr.mxu0 0.0
      %368 = vmatpush2.msra.mxu0 0.0
      %369 = vmatprep.subr.mxu0 0.0
      %370 = vmatpush2.msra.mxu0 0.0
      %371 = vmatprep.subr.mxu0 0.0
      %372 = vmatpush2.msra.mxu0 0.0
      %373 = vmatprep.subr.mxu0 0.0
      %374 = vmatpush2.msra.mxu0 0.0
      %375 = vmatprep.subr.mxu0 0.0
      %376 = vmatpush2.msra.mxu0 0.0
      %377 = vmatprep.subr.mxu0 0.0
      %378 = vmatpush2.msra.mxu0 0.0
      %379 = vmatprep.subr.mxu0 0.0
      %380 = vmatpush2.msra.mxu0 0.0
      %381 = vmatprep.subr.mxu0 0.0
      %382 = vmatpush2.msra.mxu0 0.0
      %383 = vmatprep.subr.mxu0 0.0
      %384 = vmatpush2.msra.mxu0 0.0
      %385 = vmatprep.subr.mxu0 0.0
      %386 = vmatpush2.msra.mxu0 0.0
      %387 = vmatprep.mubr.f32.mxu0 0.0
      %388 = vmatmul.mubr.f32.gmra.mxu0 %v321
      %v389 = vpop.f32.mrf.mxu0
      %v390 = vadd.f32 %v322, %v389
      %v391 = vpop.f32.mrf.mxu0
      %392 = vdwg.mxu0
      %v393 = vmax.f32 %v390, 0.0
      %v394 = vld [vmem:[%s3] sm:$0xff]
      %v395 = vld [vmem:[%s3 + $0x8] sm:$0xff]
      %v396 = vld [vmem:[%s3 + $0x10] sm:$0xff]
      %v397 = vld [vmem:[%s3 + $0x18] sm:$0xff]
      %v398 = vld [vmem:[%s3 + $0x20] sm:$0xff]
      %v399 = vld [vmem:[%s3 + $0x28] sm:$0xff]
      %v400 = vld [vmem:[%s3 + $0x30] sm:$0xff]
      %v401 = vld [vmem:[%s3 + $0x38] sm:$0xff]
      %v402 = vld [vmem:[%s3 + $0x40] sm:$0xff]
      %v403 = vld [vmem:[%s3 + $0x48] sm:$0xff]
      %v404 = vld [vmem:[%s3 + $0x50] sm:$0xff]
      %v405 = vld [vmem:[%s3 + $0x58] sm:$0xff]
      %v406 = vld [vmem:[%s3 + $0x60] sm:$0xff]
      %v407 = vld [vmem:[%s3 + $0x68] sm:$0xff]
      %v408 = vld [vmem:[%s3 + $0x70] sm:$0xff]
      %v409 = vld [vmem:[%s3 + $0x78] sm:$0xff]
      %v410 = vld [vmem:[%s4] sm:$0xff]
      %v411 = vld [vmem:[%s4 + $0x8] sm:$0xff]
      %v412 = vld [vmem:[%s4 + $0x10] sm:$0xff]
      %v413 = vld [vmem:[%s4 + $0x18] sm:$0xff]
      %v414 = vld [vmem:[%s4 + $0x20] sm:$0xff]
      %v415 = vld [vmem:[%s4 + $0x28] sm:$0xff]
      %v416 = vld [vmem:[%s4 + $0x30] sm:$0xff]
      %v417 = vld [vmem:[%s4 + $0x38] sm:$0xff]
      %v418 = vld [vmem:[%s4 + $0x40] sm:$0xff]
      %v419 = vld [vmem:[%s4 + $0x48] sm:$0xff]
      %v420 = vld [vmem:[%s4 + $0x50] sm:$0xff]
      %v421 = vld [vmem:[%s4 + $0x58] sm:$0xff]
      %v422 = vld [vmem:[%s4 + $0x60] sm:$0xff]
      %v423 = vld [vmem:[%s4 + $0x68] sm:$0xff]
      %v424 = vld [vmem:[%s4 + $0x70] sm:$0xff]
      %v425 = vld [vmem:[%s4 + $0x78] sm:$0xff]
      %vm426 = vcmask 64512
      %v428 = vsel %vm426, %v394, 0
      %v431 = vsel %vm426, %v395, 0
      %v434 = vsel %vm426, %v396, 0
      %v437 = vsel %vm426, %v397, 0
      %v440 = vsel %vm426, %v398, 0
      %v443 = vsel %vm426, %v399, 0
      %v446 = vsel %vm426, %v400, 0
      %v449 = vsel %vm426, %v401, 0
      %v452 = vsel %vm426, %v402, 0
      %v455 = vsel %vm426, %v403, 0
      %v458 = vsel %vm426, %v404, 0
      %v461 = vsel %vm426, %v405, 0
      %v464 = vsel %vm426, %v406, 0
      %v467 = vsel %vm426, %v407, 0
      %v470 = vsel %vm426, %v408, 0
      %v473 = vsel %vm426, %v409, 0
      %475 = vmatprep.subr.mxu0 0.0
      %476 = vmatpush1.msra.mxu0 0.0
      %477 = vmatprep.subr.mxu0 0.0
      %478 = vmatpush1.msra.mxu0 0.0
      %479 = vmatprep.subr.mxu0 0.0
      %480 = vmatpush1.msra.mxu0 0.0
      %481 = vmatprep.subr.mxu0 0.0
      %482 = vmatpush1.msra.mxu0 0.0
      %483 = vmatprep.subr.mxu0 0.0
      %484 = vmatpush1.msra.mxu0 0.0
      %485 = vmatprep.subr.mxu0 0.0
      %486 = vmatpush1.msra.mxu0 0.0
      %487 = vmatprep.subr.mxu0 0.0
      %488 = vmatpush1.msra.mxu0 0.0
      %489 = vmatprep.subr.mxu0 0.0
      %490 = vmatpush1.msra.mxu0 0.0
      %491 = vmatprep.subr.mxu0 0.0
      %492 = vmatpush1.msra.mxu0 0.0
      %493 = vmatprep.subr.mxu0 0.0
      %494 = vmatpush1.msra.mxu0 0.0
      %495 = vmatprep.subr.mxu0 0.0
      %496 = vmatpush1.msra.mxu0 0.0
      %497 = vmatprep.subr.mxu0 0.0
      %498 = vmatpush1.msra.mxu0 0.0
      %499 = vmatprep.subr.mxu0 0.0
      %500 = vmatpush1.msra.mxu0 0.0
      %501 = vmatprep.subr.mxu0 0.0
      %502 = vmatpush1.msra.mxu0 0.0
      %503 = vmatprep.subr.mxu0 0.0
      %504 = vmatpush1.msra.mxu0 0.0
      %505 = vmatprep.subr.mxu0 0.0
      %506 = vmatpush1.msra.mxu0 %v393
      %507 = vmatprep.subr.mxu0 0.0
      %508 = vmatpush2.msra.mxu0 0.0
      %509 = vmatprep.subr.mxu0 0.0
      %510 = vmatpush2.msra.mxu0 0.0
      %511 = vmatprep.subr.mxu0 0.0
      %512 = vmatpush2.msra.mxu0 0.0
      %513 = vmatprep.subr.mxu0 0.0
      %514 = vmatpush2.msra.mxu0 0.0
      %515 = vmatprep.subr.mxu0 0.0
      %516 = vmatpush2.msra.mxu0 0.0
      %517 = vmatprep.subr.mxu0 0.0
      %518 = vmatpush2.msra.mxu0 0.0
      %519 = vmatprep.subr.mxu0 0.0
      %520 = vmatpush2.msra.mxu0 0.0
      %521 = vmatprep.subr.mxu0 0.0
      %522 = vmatpush2.msra.mxu0 0.0
      %523 = vmatprep.subr.mxu0 0.0
      %524 = vmatpush2.msra.mxu0 0.0
      %525 = vmatprep.subr.mxu0 0.0
      %526 = vmatpush2.msra.mxu0 0.0
      %527 = vmatprep.subr.mxu0 0.0
      %528 = vmatpush2.msra.mxu0 0.0
      %529 = vmatprep.subr.mxu0 0.0
      %530 = vmatpush2.msra.mxu0 0.0
      %531 = vmatprep.subr.mxu0 0.0
      %532 = vmatpush2.msra.mxu0 0.0
      %533 = vmatprep.subr.mxu0 0.0
      %534 = vmatpush2.msra.mxu0 0.0
      %535 = vmatprep.subr.mxu0 0.0
      %536 = vmatpush2.msra.mxu0 0.0
      %537 = vmatprep.subr.mxu0 0.0
      %538 = vmatpush2.msra.mxu0 0.0
      %539 = vmatprep.mubr.f32.mxu0 0.0
      %540 = vmatmul.mubr.f32.gmra.mxu0 %v428
      %v541 = vpop.f32.mrf.mxu0
      %v542 = vadd.f32 %v410, %v541
      %v543 = vpop.f32.mrf.mxu0
      %544 = vmatprep.mubr.f32.mxu0 0.0
      %545 = vmatmul.mubr.f32.gmra.mxu0 %v431
      %v546 = vpop.f32.mrf.mxu0
      %v547 = vadd.f32 %v411, %v546
      %v548 = vpop.f32.mrf.mxu0
      %549 = vmatprep.mubr.f32.mxu0 0.0
      %550 = vmatmul.mubr.f32.gmra.mxu0 %v434
      %v551 = vpop.f32.mrf.mxu0
      %v552 = vadd.f32 %v412, %v551
      %v553 = vpop.f32.mrf.mxu0
      %554 = vmatprep.mubr.f32.mxu0 0.0
      %555 = vmatmul.mubr.f32.gmra.mxu0 %v437
      %v556 = vpop.f32.mrf.mxu0
      %v557 = vadd.f32 %v413, %v556
      %v558 = vpop.f32.mrf.mxu0
      %559 = vmatprep.mubr.f32.mxu0 0.0
      %560 = vmatmul.mubr.f32.gmra.mxu0 %v440
      %v561 = vpop.f32.mrf.mxu0
      %v562 = vadd.f32 %v414, %v561
      %v563 = vpop.f32.mrf.mxu0
      %564 = vmatprep.mubr.f32.mxu0 0.0
      %565 = vmatmul.mubr.f32.gmra.mxu0 %v443
      %v566 = vpop.f32.mrf.mxu0
      %v567 = vadd.f32 %v415, %v566
      %v568 = vpop.f32.mrf.mxu0
      %569 = vmatprep.mubr.f32.mxu0 0.0
      %570 = vmatmul.mubr.f32.gmra.mxu0 %v446
      %v571 = vpop.f32.mrf.mxu0
      %v572 = vadd.f32 %v416, %v571
      %v573 = vpop.f32.mrf.mxu0
      %574 = vmatprep.mubr.f32.mxu0 0.0
      %575 = vmatmul.mubr.f32.gmra.mxu0 %v449
      %v576 = vpop.f32.mrf.mxu0
      %v577 = vadd.f32 %v417, %v576
      %v578 = vpop.f32.mrf.mxu0
      %579 = vmatprep.mubr.f32.mxu0 0.0
      %580 = vmatmul.mubr.f32.gmra.mxu0 %v452
      %v581 = vpop.f32.mrf.mxu0
      %v582 = vadd.f32 %v418, %v581
      %v583 = vpop.f32.mrf.mxu0
      %584 = vmatprep.mubr.f32.mxu0 0.0
      %585 = vmatmul.mubr.f32.gmra.mxu0 %v455
      %v586 = vpop.f32.mrf.mxu0
      %v587 = vadd.f32 %v419, %v586
      %v588 = vpop.f32.mrf.mxu0
      %589 = vmatprep.mubr.f32.mxu0 0.0
      %590 = vmatmul.mubr.f32.gmra.mxu0 %v458
      %v591 = vpop.f32.mrf.mxu0
      %v592 = vadd.f32 %v420, %v591
      %v593 = vpop.f32.mrf.mxu0
      %594 = vmatprep.mubr.f32.mxu0 0.0
      %595 = vmatmul.mubr.f32.gmra.mxu0 %v461
      %v596 = vpop.f32.mrf.mxu0
      %v597 = vadd.f32 %v421, %v596
      %v598 = vpop.f32.mrf.mxu0
      %599 = vmatprep.mubr.f32.mxu0 0.0
      %600 = vmatmul.mubr.f32.gmra.mxu0 %v464
      %v601 = vpop.f32.mrf.mxu0
      %v602 = vadd.f32 %v422, %v601
      %v603 = vpop.f32.mrf.mxu0
      %604 = vmatprep.mubr.f32.mxu0 0.0
      %605 = vmatmul.mubr.f32.gmra.mxu0 %v467
      %v606 = vpop.f32.mrf.mxu0
      %v607 = vadd.f32 %v423, %v606
      %v608 = vpop.f32.mrf.mxu0
      %609 = vmatprep.mubr.f32.mxu0 0.0
      %610 = vmatmul.mubr.f32.gmra.mxu0 %v470
      %v611 = vpop.f32.mrf.mxu0
      %v612 = vadd.f32 %v424, %v611
      %v613 = vpop.f32.mrf.mxu0
      %614 = vmatprep.mubr.f32.mxu0 0.0
      %615 = vmatmul.mubr.f32.gmra.mxu0 %v473
      %v616 = vpop.f32.mrf.mxu0
      %v617 = vadd.f32 %v425, %v616
      %v618 = vpop.f32.mrf.mxu0
      %619 = vdwg.mxu0
      %v620 = vxor.u32 %v542, 2147483648
      %v621 = vxor.u32 %v547, 2147483648
      %v622 = vxor.u32 %v552, 2147483648
      %v623 = vxor.u32 %v557, 2147483648
      %v624 = vxor.u32 %v562, 2147483648
      %v625 = vxor.u32 %v567, 2147483648
      %v626 = vxor.u32 %v572, 2147483648
      %v627 = vxor.u32 %v577, 2147483648
      %v628 = vxor.u32 %v582, 2147483648
      %v629 = vxor.u32 %v587, 2147483648
      %v630 = vxor.u32 %v592, 2147483648
      %v631 = vxor.u32 %v597, 2147483648
      %v632 = vxor.u32 %v602, 2147483648
      %v633 = vxor.u32 %v607, 2147483648
      %v634 = vxor.u32 %v612, 2147483648
      %v635 = vxor.u32 %v617, 2147483648
      %v636 = vmul.f32 %v620, 1.442695
      %v637 = vpow.pop %v636
      %v638 = vmul.f32 %v621, 1.442695
      %v639 = vpow.pop %v638
      %v640 = vmul.f32 %v622, 1.442695
      %v641 = vpow.pop %v640
      %v642 = vmul.f32 %v623, 1.442695
      %v643 = vpow.pop %v642
      %v644 = vmul.f32 %v624, 1.442695
      %v645 = vpow.pop %v644
      %v646 = vmul.f32 %v625, 1.442695
      %v647 = vpow.pop %v646
      %v648 = vmul.f32 %v626, 1.442695
      %v649 = vpow.pop %v648
      %v650 = vmul.f32 %v627, 1.442695
      %v651 = vpow.pop %v650
      %v652 = vmul.f32 %v628, 1.442695
      %v653 = vpow.pop %v652
      %v654 = vmul.f32 %v629, 1.442695
      %v655 = vpow.pop %v654
      %v656 = vmul.f32 %v630, 1.442695
      %v657 = vpow.pop %v656
      %v658 = vmul.f32 %v631, 1.442695
      %v659 = vpow.pop %v658
      %v660 = vmul.f32 %v632, 1.442695
      %v661 = vpow.pop %v660
      %v662 = vmul.f32 %v633, 1.442695
      %v663 = vpow.pop %v662
      %v664 = vmul.f32 %v634, 1.442695
      %v665 = vpow.pop %v664
      %v666 = vmul.f32 %v635, 1.442695
      %v667 = vpow.pop %v666
      %v668 = vadd.f32 %v637, 1.0
      %v669 = vadd.f32 %v639, 1.0
      %v670 = vadd.f32 %v641, 1.0
      %v671 = vadd.f32 %v643, 1.0
      %v672 = vadd.f32 %v645, 1.0
      %v673 = vadd.f32 %v647, 1.0
      %v674 = vadd.f32 %v649, 1.0
      %v675 = vadd.f32 %v651, 1.0
      %v676 = vadd.f32 %v653, 1.0
      %v677 = vadd.f32 %v655, 1.0
      %v678 = vadd.f32 %v657, 1.0
      %v679 = vadd.f32 %v659, 1.0
      %v680 = vadd.f32 %v661, 1.0
      %v681 = vadd.f32 %v663, 1.0
      %v682 = vadd.f32 %v665, 1.0
      %v683 = vadd.f32 %v667, 1.0
      %v684 = vrcp.pop %v668
      %v685 = vmul.f32 1.0, %v684
      %v686 = vrcp.pop %v669
      %v687 = vmul.f32 1.0, %v686
      %v688 = vrcp.pop %v670
      %v689 = vmul.f32 1.0, %v688
      %v690 = vrcp.pop %v671
      %v691 = vmul.f32 1.0, %v690
      %v692 = vrcp.pop %v672
      %v693 = vmul.f32 1.0, %v692
      %v694 = vrcp.pop %v673
      %v695 = vmul.f32 1.0, %v694
      %v696 = vrcp.pop %v674
      %v697 = vmul.f32 1.0, %v696
      %v698 = vrcp.pop %v675
      %v699 = vmul.f32 1.0, %v698
      %v700 = vrcp.pop %v676
      %v701 = vmul.f32 1.0, %v700
      %v702 = vrcp.pop %v677
      %v703 = vmul.f32 1.0, %v702
      %v704 = vrcp.pop %v678
      %v705 = vmul.f32 1.0, %v704
      %v706 = vrcp.pop %v679
      %v707 = vmul.f32 1.0, %v706
      %v708 = vrcp.pop %v680
      %v709 = vmul.f32 1.0, %v708
      %v710 = vrcp.pop %v681
      %v711 = vmul.f32 1.0, %v710
      %v712 = vrcp.pop %v682
      %v713 = vmul.f32 1.0, %v712
      %v714 = vrcp.pop %v683
      %v715 = vmul.f32 1.0, %v714
      %717 = vset.pattern.permute.xlu0 0
      %718 = vperm.xlu0 %717, %v685
      %v719 = vpop.permute.xlu0 %718
      %722 = vset.pattern.permute.xlu0 0
      %723 = vperm.xlu0 %722, %v687
      %v724 = vpop.permute.xlu0 %723
      %727 = vset.pattern.permute.xlu0 0
      %728 = vperm.xlu0 %727, %v689
      %v729 = vpop.permute.xlu0 %728
      %732 = vset.pattern.permute.xlu0 0
      %733 = vperm.xlu0 %732, %v691
      %v734 = vpop.permute.xlu0 %733
      %737 = vset.pattern.permute.xlu0 0
      %738 = vperm.xlu0 %737, %v693
      %v739 = vpop.permute.xlu0 %738
      %742 = vset.pattern.permute.xlu0 0
      %743 = vperm.xlu0 %742, %v695
      %v744 = vpop.permute.xlu0 %743
      %747 = vset.pattern.permute.xlu0 0
      %748 = vperm.xlu0 %747, %v697
      %v749 = vpop.permute.xlu0 %748
      %752 = vset.pattern.permute.xlu0 0
      %753 = vperm.xlu0 %752, %v699
      %v754 = vpop.permute.xlu0 %753
      %757 = vset.pattern.permute.xlu0 0
      %758 = vperm.xlu0 %757, %v701
      %v759 = vpop.permute.xlu0 %758
      %762 = vset.pattern.permute.xlu0 0
      %763 = vperm.xlu0 %762, %v703
      %v764 = vpop.permute.xlu0 %763
      %767 = vset.pattern.permute.xlu0 0
      %768 = vperm.xlu0 %767, %v705
      %v769 = vpop.permute.xlu0 %768
      %772 = vset.pattern.permute.xlu0 0
      %773 = vperm.xlu0 %772, %v707
      %v774 = vpop.permute.xlu0 %773
      %777 = vset.pattern.permute.xlu0 0
      %778 = vperm.xlu0 %777, %v709
      %v779 = vpop.permute.xlu0 %778
      %782 = vset.pattern.permute.xlu0 0
      %783 = vperm.xlu0 %782, %v711
      %v784 = vpop.permute.xlu0 %783
      %787 = vset.pattern.permute.xlu0 0
      %788 = vperm.xlu0 %787, %v713
      %v789 = vpop.permute.xlu0 %788
      %792 = vset.pattern.permute.xlu0 0
      %793 = vperm.xlu0 %792, %v715
      %v794 = vpop.permute.xlu0 %793
      %v796 = vmul.f32 %v225, %v719
      %v797 = vmul.f32 %v226, %v719
      %v798 = vmul.f32 %v227, %v724
      %v799 = vmul.f32 %v228, %v724
      %v800 = vmul.f32 %v229, %v729
      %v801 = vmul.f32 %v230, %v729
      %v802 = vmul.f32 %v231, %v734
      %v803 = vmul.f32 %v232, %v734
      %v804 = vmul.f32 %v233, %v739
      %v805 = vmul.f32 %v234, %v739
      %v806 = vmul.f32 %v235, %v744
      %v807 = vmul.f32 %v236, %v744
      %v808 = vmul.f32 %v237, %v749
      %v809 = vmul.f32 %v238, %v749
      %v810 = vmul.f32 %v239, %v754
      %v811 = vmul.f32 %v240, %v754
      %v812 = vmul.f32 %v241, %v759
      %v813 = vmul.f32 %v242, %v759
      %v814 = vmul.f32 %v243, %v764
      %v815 = vmul.f32 %v244, %v764
      %v816 = vmul.f32 %v245, %v769
      %v817 = vmul.f32 %v246, %v769
      %v818 = vmul.f32 %v247, %v774
      %v819 = vmul.f32 %v248, %v774
      %v820 = vmul.f32 %v249, %v779
      %v821 = vmul.f32 %v250, %v779
      %v822 = vmul.f32 %v251, %v784
      %v823 = vmul.f32 %v252, %v784
      %v824 = vmul.f32 %v253, %v789
      %v825 = vmul.f32 %v254, %v789
      %v826 = vmul.f32 %v255, %v794
      %v827 = vmul.f32 %v256, %v794
      %828 = vst [vmem:[%s224] sm:$0xff] %v796
      %829 = vst [vmem:[%s224 + $0x8] sm:$0xff] %v797
      %830 = vst [vmem:[%s224 + $0x10] sm:$0xff] %v798
      %831 = vst [vmem:[%s224 + $0x18] sm:$0xff] %v799
      %832 = vst [vmem:[%s224 + $0x20] sm:$0xff] %v800
      %833 = vst [vmem:[%s224 + $0x28] sm:$0xff] %v801
      %834 = vst [vmem:[%s224 + $0x30] sm:$0xff] %v802
      %835 = vst [vmem:[%s224 + $0x38] sm:$0xff] %v803
      %836 = vst [vmem:[%s224 + $0x40] sm:$0xff] %v804
      %837 = vst [vmem:[%s224 + $0x48] sm:$0xff] %v805
      %838 = vst [vmem:[%s224 + $0x50] sm:$0xff] %v806
      %839 = vst [vmem:[%s224 + $0x58] sm:$0xff] %v807
      %840 = vst [vmem:[%s224 + $0x60] sm:$0xff] %v808
      %841 = vst [vmem:[%s224 + $0x68] sm:$0xff] %v809
      %842 = vst [vmem:[%s224 + $0x70] sm:$0xff] %v810
      %843 = vst [vmem:[%s224 + $0x78] sm:$0xff] %v811
      %844 = vst [vmem:[%s224 + $0x80] sm:$0xff] %v812
      %845 = vst [vmem:[%s224 + $0x88] sm:$0xff] %v813
      %846 = vst [vmem:[%s224 + $0x90] sm:$0xff] %v814
      %847 = vst [vmem:[%s224 + $0x98] sm:$0xff] %v815
      %848 = vst [vmem:[%s224 + $0xa0] sm:$0xff] %v816
      %849 = vst [vmem:[%s224 + $0xa8] sm:$0xff] %v817
      %850 = vst [vmem:[%s224 + $0xb0] sm:$0xff] %v818
      %851 = vst [vmem:[%s224 + $0xb8] sm:$0xff] %v819
      %852 = vst [vmem:[%s224 + $0xc0] sm:$0xff] %v820
      %853 = vst [vmem:[%s224 + $0xc8] sm:$0xff] %v821
      %854 = vst [vmem:[%s224 + $0xd0] sm:$0xff] %v822
      %855 = vst [vmem:[%s224 + $0xd8] sm:$0xff] %v823
      %856 = vst [vmem:[%s224 + $0xe0] sm:$0xff] %v824
      %857 = vst [vmem:[%s224 + $0xe8] sm:$0xff] %v825
      %858 = vst [vmem:[%s224 + $0xf0] sm:$0xff] %v826
      %859 = vst [vmem:[%s224 + $0xf8] sm:$0xff] %v827
      %p860 = scmp.lt.s32.totalorder %s16, 1
      %s861 = scalar_select %p860, %s16, 1
      %s862 = smul.addr %s861, 32
      %s863 = smul.addr %s862, 8
      %s864 = scalar_lea.vmem %s5, %s863
      // Predicated region
      $region41: #{se_block_forward.1} parent=39 // pred_check
        %p865 = pneg %p144
      $region42: #{se_block_forward.1} parent=39 // pred_check_branch
        %867 = sbr.rel (%p865) target = $region44
      $region43: #{se_block_forward.1} parent=39 // pred_region
        _
      $region44: #{se_block_forward.1} parent=39 // pred_fallthru
        _
    $region40: #{se_block_forward.1} parent=5 // pred_fallthru
      _
    %p868 = scmp.le.s32.totalorder 2, %s11
    // Predicated region
    $region45: #{se_block_forward.1} parent=5 // pred_check
      %p869 = pneg %p868
    $region46: #{se_block_forward.1} parent=5 // pred_check_branch
      %871 = sbr.rel (%p869) target = $region48
    $region47: #{se_block_forward.1} parent=5 // pred_region
      %s872 = ssub.s32 %s11, 2
      // Predicated region
      $region49: #{se_block_forward.1} parent=47 // pred_check
        %p873 = pneg %p150
      $region50: #{se_block_forward.1} parent=47 // pred_check_branch
        %875 = sbr.rel (%p873) target = $region52
      $region51: #{se_block_forward.1} parent=47 // pred_region
        %p876 = scmp.lt.s32.totalorder %s17, 1
        %s877 = scalar_select %p876, %s17, 1
        %s878 = smul.addr %s877, 32
        %s879 = smul.addr %s878, 8
        %s880 = scalar_lea.vmem %s5, %s879
      $region52: #{se_block_forward.1} parent=47 // pred_fallthru
        _
    $region48: #{se_block_forward.1} parent=5 // pred_fallthru
      _
  $region6: #{se_block_forward.1} parent=0 // loop_footer
    %s15 = sadd.s32 1, %s11
  $region7: #{se_block_forward.1} parent=0 // loop_footer_branch
    %10 = sbr.rel target = $region3
  $region8: #{se_block_forward.1} parent=0 // loop_exit
    _

</llo_original>
